<compile_context>
chip_gen: v7x
topology: tpu7x:2x2x1
jax: 0.10.0
libtpu: 0.0.40
codegen_flags: <defaults>
</compile_context>

<pallas_src>
import functools

import jax
import jax.numpy as jnp
from jax.experimental import pallas as pl
from jax.experimental.pallas import tpu as pltpu


# ---------------------------------------------------------------------------
# Host-side glue (layout only; all compute happens in the kernel).
# ---------------------------------------------------------------------------

def _im2col_3x3_taps(x):
    """x: [B, H, W] single channel -> taps [B, 9, H*W] (pad=1, stride=1).

    Taps are on the (small) sublane axis, pixels on the lane axis, so the
    kernel's DMA and VMEM layout are lane-dense.
    """
    B, H, W = x.shape
    xp = jnp.pad(x, ((0, 0), (1, 1), (1, 1)))
    taps = [xp[:, dy:dy + H, dx:dx + W].reshape(B, H * W)
            for dy in range(3) for dx in range(3)]
    return jnp.stack(taps, axis=1)                     # [B, 9, HW]


def _block_diag(a, b):
    ka, na = a.shape
    kb, nb = b.shape
    top = jnp.concatenate([a, jnp.zeros((ka, nb), a.dtype)], axis=1)
    bot = jnp.concatenate([jnp.zeros((kb, na), b.dtype), b], axis=1)
    return jnp.concatenate([top, bot], axis=0)


def _pad2d(a, rows, cols):
    r, c = a.shape
    return jnp.pad(a, ((0, rows - r), (0, cols - c)))


def _round_up(x, m):
    return ((x + m - 1) // m) * m


def _choose_tile_hw(HW, Cp, max_tile_hw, vmem_budget_bytes):
    """Largest lane-aligned (multiple of 128) pixel tile dividing HW that keeps
    the double-buffered pipeline within the VMEM budget."""
    per_col = 2 * (32 * 2) + Cp * 4      # 2x bf16 patch column (18->32 sublanes) + f32 conv
    fixed = 2 << 20                      # weights, accumulator, slack
    cols = max(128, (vmem_budget_bytes - fixed) // per_col)
    tile = min(HW, max_tile_hw, (cols // 128) * 128)
    tile = max(128, (tile // 128) * 128)
    while tile > 128 and HW % tile != 0:
        tile -= 128
    if HW % tile != 0:
        tile = HW                        # fall back to a full-extent block along HW
    return tile


def _vmem_bytes_estimate(tile_hw, Cp, Dp):
    """Rough padded-VMEM footprint of one pipelined step (all buffers)."""
    return (
        2 * 32 * tile_hw * 2             # patches block (18->32 sublanes), double-buffered, bf16
        + Cp * tile_hw * 4               # f32 conv intermediate
        + 2 * Cp * 128 * 2               # cw [Cp, 18] lane-padded, double-buffered
        + 2 * Cp * 128 * 4               # cb [Cp, 1]  lane-padded, double-buffered
        + 2 * Cp * Dp * 4                # fw, double-buffered
        + 4 * 8 * Dp * 4                 # fb + out row blocks (sublane-padded)
        + Cp * 128 * 4                   # acc scratch (lane-padded)
        + 2 * Cp * Cp * 4                # finalize relayout temporaries
    )


# ---------------------------------------------------------------------------
# Kernel: fused red|green conv -> ReLU -> streamed global-average-pool -> FC.
# Grid = (batch b [parallel], pixel tile t [arbitrary / reduction]).
# ---------------------------------------------------------------------------

def _fish_fused_kernel(inv_hw, patches_ref, cw_ref, cb_ref, fw_ref, fb_ref,
                       out_ref, acc_ref):
    """
    patches_ref: [1, 18, tile] bf16  (9 red taps | 9 green taps; pixels lane-dense)
    cw_ref:      [Cp, 18]      bf16  block-diag fused conv weights
    cb_ref:      [Cp, 1]       f32   fused conv bias (column)
    fw_ref:      [Cp, Dp]      f32   block-diag fused FC weights
    fb_ref:      [1, Dp]       f32   fused FC bias (row)
    out_ref:     [1, 1, Dp]    f32   fused feature row for batch b
    acc_ref:     [Cp, 1]       f32   running sum of ReLU(conv) over pixels
    """
    t = pl.program_id(1)

    @pl.when(t == 0)
    def _init():
        acc_ref[...] = jnp.zeros_like(acc_ref)

    x_t = patches_ref[0]                                        # [18, tile] bf16
    # Fused red|green 3x3 conv as a single MXU matmul: [Cp, 18] @ [18, tile].
    conv = jnp.dot(cw_ref[...], x_t,
                   preferred_element_type=jnp.float32)          # [Cp, tile]
    conv = jnp.maximum(conv + cb_ref[...], 0.0)                 # bias + ReLU (VPU)
    # Streamed global-average-pool: accumulate per-channel partial sums.
    acc_ref[...] += jnp.sum(conv, axis=1, keepdims=True)        # [Cp, 1]

    @pl.when(t == pl.num_programs(1) - 1)
    def _finalize():
        cp = acc_ref.shape[0]
        pooled_col = acc_ref[...] * inv_hw                      # [Cp, 1] mean over H*W
        # Column -> row relayout without an XLU transpose: masked sublane reduce.
        rows = jax.lax.broadcasted_iota(jnp.int32, (cp, cp), 0)
        cols = jax.lax.broadcasted_iota(jnp.int32, (cp, cp), 1)
        eye = jnp.where(rows == cols, jnp.float32(1.0), jnp.float32(0.0))
        pooled_row = jnp.sum(pooled_col * eye, axis=0, keepdims=True)   # [1, Cp]
        # Fused FC: lane-dense [1, Dp] output row (red | green concatenated).
        out = jnp.dot(pooled_row, fw_ref[...],
                      preferred_element_type=jnp.float32) + fb_ref[...]
        out_ref[0] = out


# ---------------------------------------------------------------------------
# Wrapper: FISHEncoder.forward
# ---------------------------------------------------------------------------

def fish_encoder_forward(rgb_fish, red_params, green_params, *,
                         max_tile_hw=2048, vmem_budget_bytes=24 << 20):
    """Pallas implementation of FISHEncoder.forward.

    rgb_fish: [B, 3, H, W] float32 (NCHW, like the PyTorch module).
    Returns tuple([out_features]) with out_features: [B, 2*D].
    """
    assert rgb_fish.ndim == 4
    B, C, H, W = rgb_fish.shape
    assert C >= 3
    HW = H * W

    red_channel = rgb_fish[:, 0]       # [B, H, W]
    green_channel = rgb_fish[:, 1]     # [B, H, W]
    _nuc_channel = rgb_fish[:, 2]      # extracted but unused in forward (as in PyTorch)

    # Lane-dense, bf16 im2col patches: [B, 18, HW] (9 red taps | 9 green taps).
    patches = jnp.concatenate(
        [_im2col_3x3_taps(red_channel), _im2col_3x3_taps(green_channel)],
        axis=1).astype(jnp.bfloat16)

    C1 = red_params["conv_w"].shape[1]
    D = red_params["fc_w"].shape[1]
    Cp = _round_up(2 * C1, 128)        # fused conv width, lane-padded
    Dp = _round_up(2 * D, 128)         # fused output width, lane-padded

    # Block-diagonal fused weights (red | green), zero-padded to lane multiples.
    cw_t = _pad2d(_block_diag(red_params["conv_w"].T, green_params["conv_w"].T),
                  Cp, 18).astype(jnp.bfloat16)                                   # [Cp, 18]
    cb_c = _pad2d(jnp.concatenate([red_params["conv_b"],
                                   green_params["conv_b"]], axis=1).T, Cp, 1)    # [Cp, 1]
    fw_f = _pad2d(_block_diag(red_params["fc_w"], green_params["fc_w"]), Cp, Dp)  # [Cp, Dp]
    fb_f = _pad2d(jnp.concatenate([red_params["fc_b"],
                                   green_params["fc_b"]], axis=1), 1, Dp)         # [1, Dp]

    tile = _choose_tile_hw(HW, Cp, max_tile_hw, vmem_budget_bytes)
    n_tiles = max(1, HW // tile)
    vmem_limit = int(min(max(4 * _vmem_bytes_estimate(tile, Cp, Dp), 16 << 20),
                         48 << 20))

    flops = 2 * B * HW * 18 * Cp + 3 * B * HW * Cp + 2 * B * Cp * Dp
    bytes_accessed = int(patches.size * 2 + cw_t.size * 2 + cb_c.size * 4
                         + fw_f.size * 4 + fb_f.size * 4 + B * Dp * 4)

    kernel = functools.partial(_fish_fused_kernel, float(1.0 / HW))

    out = pl.pallas_call(
        kernel,
        out_shape=jax.ShapeDtypeStruct((B, 1, Dp), jnp.float32),
        grid_spec=pltpu.PrefetchScalarGridSpec(
            num_scalar_prefetch=0,
            grid=(B, n_tiles),
            in_specs=[
                pl.BlockSpec((1, 18, tile), lambda b, t: (b, 0, t)),   # streamed patches
                pl.BlockSpec((Cp, 18), lambda b, t: (0, 0)),           # resident weights
                pl.BlockSpec((Cp, 1), lambda b, t: (0, 0)),
                pl.BlockSpec((Cp, Dp), lambda b, t: (0, 0)),
                pl.BlockSpec((1, Dp), lambda b, t: (0, 0)),
            ],
            out_specs=pl.BlockSpec((1, 1, Dp), lambda b, t: (b, 0, 0)),
            scratch_shapes=[pltpu.VMEM((Cp, 1), jnp.float32)],
        ),
        compiler_params=pltpu.CompilerParams(
            dimension_semantics=("parallel", "arbitrary"),
            vmem_limit_bytes=vmem_limit,
        ),
        cost_estimate=pl.CostEstimate(
            flops=flops, transcendentals=0, bytes_accessed=bytes_accessed),
    )(patches, cw_t, cb_c, fw_f, fb_f)

    # torch.cat((red_features, green_features), dim=1): columns [0, 2*D).
    out_features = out.reshape(B, Dp)[:, :2 * D]
    return (out_features,)


# ---------------------------------------------------------------------------
# Synthetic parameters + plain-JAX reference.
# ---------------------------------------------------------------------------

def _init_encoder_params(key, C1, D):
    # conv_w corresponds to a PyTorch Conv2d(1, C1, 3) weight [C1, 1, 3, 3],
    # flattened over (dy, dx) and transposed to [9, C1].
    k1, k2, k3, k4 = jax.random.split(key, 4)
    return dict(
        conv_w=0.1 * jax.random.normal(k1, (9, C1), jnp.float32),
        conv_b=0.01 * jax.random.normal(k2, (1, C1), jnp.float32),
        fc_w=0.1 * jax.random.normal(k3, (C1, D), jnp.float32),
        fc_b=0.01 * jax.random.normal(k4, (1, D), jnp.float32),
    )


def _reference(rgb_fish, red_params, green_params, *, cast_bf16=False):
    """Plain-JAX reference of the same synthetic FISHEncoder forward."""

    def maybe_cast(a):
        return a.astype(jnp.bfloat16).astype(jnp.float32) if cast_bf16 else a

    def enc(x, p):
        patches = jnp.swapaxes(_im2col_3x3_taps(x), 1, 2)                # [B, HW, 9]
        conv = jnp.maximum(maybe_cast(patches) @ maybe_cast(p["conv_w"])
                           + p["conv_b"], 0.0)                           # [B, HW, C1]
        pooled = conv.mean(axis=1)                                       # [B, C1]
        return pooled @ p["fc_w"] + p["fc_b"]                            # [B, D]

    with jax.default_matmul_precision("highest"):
        r = enc(rgb_fish[:, 0], red_params)
        g = enc(rgb_fish[:, 1], green_params)
    return jnp.concatenate([r, g], axis=1)


if __name__ == "__main__":
    B, H, W = 2, 16, 16
    C1, D = 64, 64            # per-encoder widths -> fused 2*C1 = 2*D = 128 (lane-dense)

    key = jax.random.PRNGKey(0)
    k_in, k_params = jax.random.split(key)

    rgb_fish = jax.random.normal(k_in, (B, 3, H, W), jnp.float32)

    # green_encoder = deepcopy(red_encoder) in the PyTorch module -> same weights.
    red_params = _init_encoder_params(k_params, C1, D)
    green_params = {k: v for k, v in red_params.items()}

    # max_tile_hw=128 forces 2 pixel tiles per batch so the streamed-reduction
    # (accumulator across the "arbitrary" grid axis) path is exercised.
    (out_features,) = fish_encoder_forward(rgb_fish, red_params, green_params,
                                           max_tile_hw=128)
    out_features = jax.block_until_ready(out_features)
    assert out_features.shape == (B, 2 * D), out_features.shape

    # Tight check against a bf16-input-matched reference (same rounding as the
    # kernel's bf16 MXU operands), and a looser check against the pure-f32 model.
    ref_bf16 = _reference(rgb_fish, red_params, green_params, cast_bf16=True)
    ref_f32 = _reference(rgb_fish, red_params, green_params, cast_bf16=False)
    assert jnp.allclose(out_features, ref_bf16, atol=5e-3, rtol=5e-3)
    assert jnp.allclose(out_features, ref_f32, atol=3e-2, rtol=3e-2)

    print("KERNEL_OK")
</pallas_src>

<mosaic_0001>
module attributes {stable_mosaic.version = 11 : i64} {
  func.func @_fish_fused_kernel(%arg0: i32, %arg1: i32, %arg2: memref<1x18x128xbf16, #tpu.memory_space<vmem>>, %arg3: memref<128x18xbf16, #tpu.memory_space<vmem>>, %arg4: memref<128x1xf32, #tpu.memory_space<vmem>>, %arg5: memref<128x128xf32, #tpu.memory_space<vmem>>, %arg6: memref<1x128xf32, #tpu.memory_space<vmem>>, %arg7: memref<1x1x128xf32, #tpu.memory_space<vmem>>, %arg8: memref<128x1xf32, #tpu.memory_space<vmem>>) attributes {dimension_semantics = [#tpu.dimension_semantics<parallel>, #tpu.dimension_semantics<arbitrary>], iteration_bounds = array<i64: 2, 2>, scalar_prefetch = 0 : i64, scratch_operands = 1 : i64, tpu.core_type = #tpu.core_type<tc>, window_params = [{transform_indices = @transform_0, window_bounds = array<i64: 1, 18, 128>}, {pipeline_mode = #tpu.pipeline_mode<synchronous>, transform_indices = @transform_1, window_bounds = array<i64: 128, 18>}, {pipeline_mode = #tpu.pipeline_mode<synchronous>, transform_indices = @transform_2, window_bounds = array<i64: 128, 1>}, {pipeline_mode = #tpu.pipeline_mode<synchronous>, transform_indices = @transform_3, window_bounds = array<i64: 128, 128>}, {pipeline_mode = #tpu.pipeline_mode<synchronous>, transform_indices = @transform_4, window_bounds = array<i64: 1, 128>}, {transform_indices = @transform_5, window_bounds = array<i64: 1, 1, 128>}]} {
    %c0_i32 = arith.constant 0 : i32
    %0 = arith.cmpi eq, %arg1, %c0_i32 : i32
    %1 = arith.extui %0 : i1 to i32
    %c0_i32_0 = arith.constant 0 : i32
    %2 = arith.cmpi ne, %1, %c0_i32_0 : i32
    scf.if %2 {
      %cst_14 = arith.constant 0.000000e+00 : f32
      %20 = vector.broadcast %cst_14 : f32 to vector<128x1xf32>
      %c0_15 = arith.constant 0 : index
      %c0_16 = arith.constant 0 : index
      %21 = vector.load %arg8[%c0_15, %c0_16] : memref<128x1xf32, #tpu.memory_space<vmem>>, vector<128x1xf32>
      tpu.vector_store %arg8[%c0_15, %c0_16], %20 {strides = array<i32>} : memref<128x1xf32, #tpu.memory_space<vmem>>, vector<128x1xf32>,
    } else {
    }
    %c0 = arith.constant 0 : index
    %c0_1 = arith.constant 0 : index
    %c0_2 = arith.constant 0 : index
    %3 = vector.load %arg2[%c0, %c0_1, %c0_2] : memref<1x18x128xbf16, #tpu.memory_space<vmem>>, vector<1x18x128xbf16>
    %4 = vector.shape_cast %3 : vector<1x18x128xbf16> to vector<18x128xbf16>
    %c0_3 = arith.constant 0 : index
    %c0_4 = arith.constant 0 : index
    %5 = vector.load %arg3[%c0_3, %c0_4] : memref<128x18xbf16, #tpu.memory_space<vmem>>, vector<128x18xbf16>
    %cst = arith.constant dense<0.000000e+00> : vector<128x128xf32>
    %6 = tpu.matmul %5, %4, %cst {dimension_numbers = #tpu.dot_dimension_numbers<[1], [0], [0], [1], [0, 0, 1, 1], [], []>} : vector<128x18xbf16>, vector<18x128xbf16>, vector<128x128xf32> -> vector<128x128xf32>
    %c0_5 = arith.constant 0 : index
    %c0_6 = arith.constant 0 : index
    %7 = vector.load %arg4[%c0_5, %c0_6] : memref<128x1xf32, #tpu.memory_space<vmem>>, vector<128x1xf32>
    %8 = vector.broadcast %7 : vector<128x1xf32> to vector<128x128xf32>
    %9 = arith.addf %6, %8 : vector<128x128xf32>
    %cst_7 = arith.constant 0.000000e+00 : f32
    %10 = vector.broadcast %cst_7 : f32 to vector<128x128xf32>
    %11 = arith.maximumf %9, %10 : vector<128x128xf32>
    %c0_8 = arith.constant 0 : index
    %c0_9 = arith.constant 0 : index
    %12 = vector.load %arg8[%c0_8, %c0_9] : memref<128x1xf32, #tpu.memory_space<vmem>>, vector<128x1xf32>
    %cst_10 = arith.constant dense<0.000000e+00> : vector<128xf32>
    %13 = vector.multi_reduction <add>, %11, %cst_10 [1] : vector<128x128xf32> to vector<128xf32>
    %14 = vector.shape_cast %13 : vector<128xf32> to vector<128x1xf32>
    %15 = arith.addf %12, %14 : vector<128x1xf32>
    %c0_11 = arith.constant 0 : index
    %c0_12 = arith.constant 0 : index
    %16 = vector.load %arg8[%c0_11, %c0_12] : memref<128x1xf32, #tpu.memory_space<vmem>>, vector<128x1xf32>
    tpu.vector_store %arg8[%c0_11, %c0_12], %15 {strides = array<i32>} : memref<128x1xf32, #tpu.memory_space<vmem>>, vector<128x1xf32>,
    %c1_i32 = arith.constant 1 : i32
    %17 = arith.cmpi eq, %arg1, %c1_i32 : i32
    %18 = arith.extui %17 : i1 to i32
    %c0_i32_13 = arith.constant 0 : i32
    %19 = arith.cmpi ne, %18, %c0_i32_13 : i32
    scf.if %19 {
      %c0_14 = arith.constant 0 : index
      %c0_15 = arith.constant 0 : index
      %20 = vector.load %arg8[%c0_14, %c0_15] : memref<128x1xf32, #tpu.memory_space<vmem>>, vector<128x1xf32>
      %cst_16 = arith.constant 3.906250e-03 : f32
      %21 = vector.broadcast %cst_16 : f32 to vector<128x1xf32>
      %22 = arith.mulf %20, %21 : vector<128x1xf32>
      %23 = tpu.iota {dimensions = array<i32: 0>} : vector<128x128xi32>
      %24 = tpu.iota {dimensions = array<i32: 1>} : vector<128x128xi32>
      %25 = arith.cmpi eq, %23, %24 : vector<128x128xi32>
      %cst_17 = arith.constant 1.000000e+00 : f32
      %cst_18 = arith.constant 0.000000e+00 : f32
      %26 = vector.broadcast %cst_17 : f32 to vector<128x128xf32>
      %27 = vector.broadcast %cst_18 : f32 to vector<128x128xf32>
      %28 = arith.select %25, %26, %27 : vector<128x128xi1>, vector<128x128xf32>
      %29 = vector.broadcast %22 : vector<128x1xf32> to vector<128x128xf32>
      %30 = arith.mulf %29, %28 : vector<128x128xf32>
      %cst_19 = arith.constant dense<0.000000e+00> : vector<128xf32>
      %31 = vector.multi_reduction <add>, %30, %cst_19 [0] : vector<128x128xf32> to vector<128xf32>
      %32 = vector.shape_cast %31 : vector<128xf32> to vector<1x128xf32>
      %c0_20 = arith.constant 0 : index
      %c0_21 = arith.constant 0 : index
      %33 = vector.load %arg5[%c0_20, %c0_21] : memref<128x128xf32, #tpu.memory_space<vmem>>, vector<128x128xf32>
      %cst_22 = arith.constant dense<0.000000e+00> : vector<1x128xf32>
      %34 = tpu.matmul %32, %33, %cst_22 {dimension_numbers = #tpu.dot_dimension_numbers<[1], [0], [0], [1], [0, 0, 1, 1], [], []>} : vector<1x128xf32>, vector<128x128xf32>, vector<1x128xf32> -> vector<1x128xf32>
      %c0_23 = arith.constant 0 : index
      %c0_24 = arith.constant 0 : index
      %35 = vector.load %arg6[%c0_23, %c0_24] : memref<1x128xf32, #tpu.memory_space<vmem>>, vector<1x128xf32>
      %36 = arith.addf %34, %35 : vector<1x128xf32>
      %c0_25 = arith.constant 0 : index
      %c0_26 = arith.constant 0 : index
      %c0_27 = arith.constant 0 : index
      %37 = vector.load %arg7[%c0_25, %c0_26, %c0_27] : memref<1x1x128xf32, #tpu.memory_space<vmem>>, vector<1x1x128xf32>
      %38 = vector.shape_cast %37 : vector<1x1x128xf32> to vector<1x128xf32>
      %39 = vector.shape_cast %36 : vector<1x128xf32> to vector<1x1x128xf32>
      tpu.vector_store %arg7[%c0_25, %c0_26, %c0_27], %39 {strides = array<i32>} : memref<1x1x128xf32, #tpu.memory_space<vmem>>, vector<1x1x128xf32>,
    } else {
    }
    return
  }
  func.func @transform_0(%arg0: i32, %arg1: i32) -> (i32, i32, i32) {
    %c0_i32 = arith.constant 0 : i32
    %c0_i32_0 = arith.constant 0 : i32
    return %arg0, %c0_i32, %arg1 : i32, i32, i32
  }
  func.func @transform_1(%arg0: i32, %arg1: i32) -> (i32, i32) {
    %c0_i32 = arith.constant 0 : i32
    %c0_i32_0 = arith.constant 0 : i32
    %c0_i32_1 = arith.constant 0 : i32
    return %c0_i32, %c0_i32_0 : i32, i32
  }
  func.func @transform_2(%arg0: i32, %arg1: i32) -> (i32, i32) {
    %c0_i32 = arith.constant 0 : i32
    %c0_i32_0 = arith.constant 0 : i32
    %c0_i32_1 = arith.constant 0 : i32
    return %c0_i32, %c0_i32_0 : i32, i32
  }
  func.func @transform_3(%arg0: i32, %arg1: i32) -> (i32, i32) {
    %c0_i32 = arith.constant 0 : i32
    %c0_i32_0 = arith.constant 0 : i32
    %c0_i32_1 = arith.constant 0 : i32
    return %c0_i32, %c0_i32_0 : i32, i32
  }
  func.func @transform_4(%arg0: i32, %arg1: i32) -> (i32, i32) {
    %c0_i32 = arith.constant 0 : i32
    %c0_i32_0 = arith.constant 0 : i32
    %c0_i32_1 = arith.constant 0 : i32
    return %c0_i32, %c0_i32_0 : i32, i32
  }
  func.func @transform_5(%arg0: i32, %arg1: i32) -> (i32, i32, i32) {
    %c0_i32 = arith.constant 0 : i32
    %c0_i32_0 = arith.constant 0 : i32
    %c0_i32_1 = arith.constant 0 : i32
    return %arg0, %c0_i32, %c0_i32_0 : i32, i32, i32
  }
}

</mosaic_0001>

<llo_original>
// kernel: tpu_custom_call.1
$region0: #{tpu_custom_call.1}
  #allocation0 [shape = 'u32[]', space=smem, size = 0x4, offset = 0x4, fixed_abs, tag = 'smem constant byte address 0x4 - core index']
  #allocation1 [shape = 'u32[144,128]{1,0:T(1,128)}', space=vmem, size = 0x12000, scoped, tag = 'internal scratch']
  #allocation2 [shape = 'f32[128,1]{1,0:T(8,128)}', space=vmem, size = 0x10000, scoped, tag = 'scratch operand']
  %s0 = inlined_call_operand.vmem [shape: bf16[2,18,256], index: 0, kind: input, shape index: {}]
  %s1 = inlined_call_operand.vmem [shape: bf16[128,18], index: 1, kind: input, shape index: {}]
  %s2 = inlined_call_operand.vmem [shape: f32[128,1], index: 2, kind: input, shape index: {}]
  %s3 = inlined_call_operand.vmem [shape: f32[128,128], index: 3, kind: input, shape index: {}]
  %s4 = inlined_call_operand.vmem [shape: f32[1,128], index: 4, kind: input, shape index: {}]
  %s5 = inlined_call_operand.hbm [shape: f32[2,1,128], index: 5, kind: output, shape index: {}]
  %s6 = sld [smem:[#allocation0]]
  $region102: #{tpu_custom_call.1} parent=0
    _
  %s8 = ssub.s32 1, %s6
  %s9 = scalar_select 0, %s8, %s6
  $region1: #{tpu_custom_call.1} parent=0
    #allocation3 [shape = 'u8[12288]{0}', space=vmem, size = 0x3000, scoped, tag = 'input window, operand 0']
    #allocation4 [shape = 'u8[1024]{0}', space=vmem, size = 0x400, scoped, tag = 'output window, operand 0']
    #allocation5 [shape = 's32[2]{0}', space=sflag, size = 0x8, scoped, tag = 'scoped memory for tpu_custom_call.1']
    %10 = vsyncpa [#allocation5], 0
    %s11 = scalar_lea.sflag [#allocation5], 1
    %12 = vsyncpa %s11, 0
    loop: start=0, step=1, limit=6
    $region2: #{tpu_custom_call.1} parent=1 // loop_pre_header
      _
    $region3: #{tpu_custom_call.1} parent=1 // loop_header
      %s14 = sphi 0, %s18
      %p15 = scmp.ge.s32.totalorder %s14, 6
      %s21 = sphi 0, %s33
      %s22 = sphi 0, %s29
      %s23 = sphi 0, %s21
      %s24 = sphi 0, %s22
      %s25 = sphi 0, %s23
      %s26 = sphi 0, %s24
      %s38 = sphi 0, %s40
      %s41 = sphi 0, %s38
      %s42 = sphi 0, %s41
      %s58 = sphi 0, %s42
      %s62 = sphi 0, %s62
      %s64 = sphi 0, %s62
      %s65 = sphi 0, %s64
      %s79 = sphi 0, %s65
      %s83 = sphi 0, %s83
      %s85 = sphi 0, %s83
      %s86 = sphi 0, %s85
      %s100 = sphi 0, %s86
      %s104 = sphi 0, %s104
      %s106 = sphi 0, %s104
      %s107 = sphi 0, %s106
      %s121 = sphi 0, %s107
      %s125 = sphi 0, %s125
      %s127 = sphi 0, %s125
      %s128 = sphi 0, %s127
      %s142 = sphi 0, %s128
      %s148 = sphi 0, %s150
      %s151 = sphi 0, %s148
      %s152 = sphi 0, %s151
      %s168 = sphi 0, %s152
    $region4: #{tpu_custom_call.1} parent=1 // loop_header_branch
      %17 = sbr.rel (%p15) target = $region8
    $region5: #{tpu_custom_call.1} parent=1 // loop_body
      %s19 = ssub.s32 %s14, 1
      %s20 = ssub.s32 %s14, 2
      %s27 = sadd.s32 1, %s22
      %p28 = scmp.ge.s32.totalorder %s27, 2
      %s29 = scalar_select %p28, 0, %s27
      %s30 = sadd.s32 1, %s21
      %s31 = scalar_select %p28, %s30, %s21
      %p32 = scmp.ge.s32.totalorder %s31, 2
      %s33 = scalar_select %p32, 0, %s31
      %s34 = ssub.s32 %s21, %s33
      %s35 = ssub.s32 %s22, %s29
      %s36 = sor.u32 %s34, %s35
      %p37 = scmp.eq.s32.totalorder %s36, 0
      %s39 = sadd.s32 %s38, 1
      %s40 = scalar_select %p37, %s38, %s39
      %p43 = pneg %p37
      %p44 = scmp.eq.s32.totalorder %s14, 3
      %p45 = por %p43, %p44
      %p46 = scmp.ne.s32.totalorder %s38, %s41
      %p47 = scmp.eq.s32.totalorder %s14, 0
      %p48 = por %p46, %p47
      %p49 = scmp.ne.s32.totalorder %s38, %s41
      %p50 = scmp.eq.s32.totalorder %s19, 3
      %p51 = por %p49, %p50
      %p52 = scmp.ne.s32.totalorder %s41, %s42
      %p53 = scmp.eq.s32.totalorder %s19, 0
      %p54 = por %p52, %p53
      %p55 = scmp.ne.s32.totalorder %s41, %s42
      %p56 = scmp.eq.s32.totalorder %s20, 3
      %p57 = por %p55, %p56
      %p59 = scmp.ne.s32.totalorder %s42, %s58
      %p60 = scmp.eq.s32.totalorder %s20, 0
      %p61 = por %p59, %p60
      %s63 = sadd.s32 %s62, 1
      %p66 = scmp.eq.s32.totalorder %s14, 3
      %p67 = scmp.ne.s32.totalorder %s62, %s64
      %p68 = scmp.eq.s32.totalorder %s14, 0
      %p69 = por %p67, %p68
      %p70 = scmp.ne.s32.totalorder %s62, %s64
      %p71 = scmp.eq.s32.totalorder %s19, 3
      %p72 = por %p70, %p71
      %p73 = scmp.ne.s32.totalorder %s64, %s65
      %p74 = scmp.eq.s32.totalorder %s19, 0
      %p75 = por %p73, %p74
      %p76 = scmp.ne.s32.totalorder %s64, %s65
      %p77 = scmp.eq.s32.totalorder %s20, 3
      %p78 = por %p76, %p77
      %p80 = scmp.ne.s32.totalorder %s65, %s79
      %p81 = scmp.eq.s32.totalorder %s20, 0
      %p82 = por %p80, %p81
      %s84 = sadd.s32 %s83, 1
      %p87 = scmp.eq.s32.totalorder %s14, 3
      %p88 = scmp.ne.s32.totalorder %s83, %s85
      %p89 = scmp.eq.s32.totalorder %s14, 0
      %p90 = por %p88, %p89
      %p91 = scmp.ne.s32.totalorder %s83, %s85
      %p92 = scmp.eq.s32.totalorder %s19, 3
      %p93 = por %p91, %p92
      %p94 = scmp.ne.s32.totalorder %s85, %s86
      %p95 = scmp.eq.s32.totalorder %s19, 0
      %p96 = por %p94, %p95
      %p97 = scmp.ne.s32.totalorder %s85, %s86
      %p98 = scmp.eq.s32.totalorder %s20, 3
      %p99 = por %p97, %p98
      %p101 = scmp.ne.s32.totalorder %s86, %s100
      %p102 = scmp.eq.s32.totalorder %s20, 0
      %p103 = por %p101, %p102
      %s105 = sadd.s32 %s104, 1
      %p108 = scmp.eq.s32.totalorder %s14, 3
      %p109 = scmp.ne.s32.totalorder %s104, %s106
      %p110 = scmp.eq.s32.totalorder %s14, 0
      %p111 = por %p109, %p110
      %p112 = scmp.ne.s32.totalorder %s104, %s106
      %p113 = scmp.eq.s32.totalorder %s19, 3
      %p114 = por %p112, %p113
      %p115 = scmp.ne.s32.totalorder %s106, %s107
      %p116 = scmp.eq.s32.totalorder %s19, 0
      %p117 = por %p115, %p116
      %p118 = scmp.ne.s32.totalorder %s106, %s107
      %p119 = scmp.eq.s32.totalorder %s20, 3
      %p120 = por %p118, %p119
      %p122 = scmp.ne.s32.totalorder %s107, %s121
      %p123 = scmp.eq.s32.totalorder %s20, 0
      %p124 = por %p122, %p123
      %s126 = sadd.s32 %s125, 1
      %p129 = scmp.eq.s32.totalorder %s14, 3
      %p130 = scmp.ne.s32.totalorder %s125, %s127
      %p131 = scmp.eq.s32.totalorder %s14, 0
      %p132 = por %p130, %p131
      %p133 = scmp.ne.s32.totalorder %s125, %s127
      %p134 = scmp.eq.s32.totalorder %s19, 3
      %p135 = por %p133, %p134
      %p136 = scmp.ne.s32.totalorder %s127, %s128
      %p137 = scmp.eq.s32.totalorder %s19, 0
      %p138 = por %p136, %p137
      %p139 = scmp.ne.s32.totalorder %s127, %s128
      %p140 = scmp.eq.s32.totalorder %s20, 3
      %p141 = por %p139, %p140
      %p143 = scmp.ne.s32.totalorder %s128, %s142
      %p144 = scmp.eq.s32.totalorder %s20, 0
      %p145 = por %p143, %p144
      %s146 = ssub.s32 %s21, %s33
      %p147 = scmp.eq.s32.totalorder %s146, 0
      %s149 = sadd.s32 %s148, 1
      %s150 = scalar_select %p147, %s148, %s149
      %p153 = pneg %p147
      %p154 = scmp.eq.s32.totalorder %s14, 3
      %p155 = por %p153, %p154
      %p156 = scmp.ne.s32.totalorder %s148, %s151
      %p157 = scmp.eq.s32.totalorder %s14, 0
      %p158 = por %p156, %p157
      %p159 = scmp.ne.s32.totalorder %s148, %s151
      %p160 = scmp.eq.s32.totalorder %s19, 3
      %p161 = por %p159, %p160
      %p162 = scmp.ne.s32.totalorder %s151, %s152
      %p163 = scmp.eq.s32.totalorder %s19, 0
      %p164 = por %p162, %p163
      %p165 = scmp.ne.s32.totalorder %s151, %s152
      %p166 = scmp.eq.s32.totalorder %s20, 3
      %p167 = por %p165, %p166
      %p169 = scmp.ne.s32.totalorder %s152, %s168
      %p170 = scmp.eq.s32.totalorder %s20, 0
      %p171 = por %p169, %p170
      %p172 = scmp.le.s32.totalorder 1, %s14
      %p173 = scmp.lt.s32.totalorder %s14, 5
      %p174 = pnand %p172, %p173
      %p175 = pneg %p174
      // Predicated region
      $region9: #{tpu_custom_call.1} parent=5 // pred_check
        _
      $region10: #{tpu_custom_call.1} parent=5 // pred_check_branch
        %177 = sbr.rel (%p174) target = $region12
      $region11: #{tpu_custom_call.1} parent=5 // pred_region
        %s178 = ssub.s32 %s14, 1
        // Predicated region
        $region13: #{tpu_custom_call.1} parent=11 // pred_check
          %p179 = pneg %p75
        $region14: #{tpu_custom_call.1} parent=11 // pred_check_branch
          %181 = sbr.rel (%p179) target = $region16
        $region15: #{tpu_custom_call.1} parent=11 // pred_region
          _
        $region16: #{tpu_custom_call.1} parent=11 // pred_fallthru
          _
        // Predicated region
        $region17: #{tpu_custom_call.1} parent=11 // pred_check
          %p182 = pneg %p96
        $region18: #{tpu_custom_call.1} parent=11 // pred_check_branch
          %184 = sbr.rel (%p182) target = $region20
        $region19: #{tpu_custom_call.1} parent=11 // pred_region
          _
        $region20: #{tpu_custom_call.1} parent=11 // pred_fallthru
          _
        // Predicated region
        $region21: #{tpu_custom_call.1} parent=11 // pred_check
          %p185 = pneg %p117
        $region22: #{tpu_custom_call.1} parent=11 // pred_check_branch
          %187 = sbr.rel (%p185) target = $region24
        $region23: #{tpu_custom_call.1} parent=11 // pred_region
          _
        $region24: #{tpu_custom_call.1} parent=11 // pred_fallthru
          _
        // Predicated region
        $region25: #{tpu_custom_call.1} parent=11 // pred_check
          %p188 = pneg %p138
        $region26: #{tpu_custom_call.1} parent=11 // pred_check_branch
          %190 = sbr.rel (%p188) target = $region28
        $region27: #{tpu_custom_call.1} parent=11 // pred_region
          _
        $region28: #{tpu_custom_call.1} parent=11 // pred_fallthru
          _
      $region12: #{tpu_custom_call.1} parent=5 // pred_fallthru
        _
      %p191 = scmp.lt.s32.totalorder %s14, 4
      // Predicated region
      $region29: #{tpu_custom_call.1} parent=5 // pred_check
        %p192 = pneg %p191
      $region30: #{tpu_custom_call.1} parent=5 // pred_check_branch
        %194 = sbr.rel (%p192) target = $region32
      $region31: #{tpu_custom_call.1} parent=5 // pred_region
        // Predicated region
        $region33: #{tpu_custom_call.1} parent=31 // pred_check
          %p195 = pneg %p48
        $region34: #{tpu_custom_call.1} parent=31 // pred_check_branch
          %197 = sbr.rel (%p195) target = $region36
        $region35: #{tpu_custom_call.1} parent=31 // pred_region
          %s198 = sand.u32 %s38, 1
          %s199 = sand.u32 %s38, 1
          %s200 = smul.addr %s199, 12
          %s201 = scalar_lea.vmem [#allocation3], %s200
          %s202 = smul.addr %s21, 6
          %s203 = sadd.s32 %s22, %s202
          %s204 = smul.addr %s203, 4
          %s205 = scalar_lea.vmem %s0, %s204
          // Predicated region
          $region37: #{tpu_custom_call.1} parent=35 // pred_check
            _
          $region38: #{tpu_custom_call.1} parent=35 // pred_check_branch
            %207 = sbr.rel (0) target = $region40
          $region39: #{tpu_custom_call.1} parent=35 // pred_region
            // Predicated region
            $region41: #{tpu_custom_call.1} parent=39 // pred_check
              _
            $region42: #{tpu_custom_call.1} parent=39 // pred_check_branch
              %209 = sbr.rel target = $region44
            $region43: #{tpu_custom_call.1} parent=39 // pred_region
              // Predicated region
              $region56: #{tpu_custom_call.1} parent=43 // pred_check
                _
              $region57: #{tpu_custom_call.1} parent=43 // pred_check_branch
                %228 = sbr.rel (0) target = $region59
              $region58: #{tpu_custom_call.1} parent=43 // pred_region
                loop: start=0, step=1, limit=1
                $region60: #{tpu_custom_call.1} parent=58 // loop_pre_header
                  _
                $region61: #{tpu_custom_call.1} parent=58 // loop_header
                  %s230 = sphi 0, %s234
                  %p231 = scmp.ge.s32.totalorder %s230, 1
                  %s235 = sphi %s205, %s205
                  %s236 = sphi %s201, %s201
                $region62: #{tpu_custom_call.1} parent=58 // loop_header_branch
                  %233 = sbr.rel (%p231) target = $region66
                $region63: #{tpu_custom_call.1} parent=58 // loop_body
                  _
                $region64: #{tpu_custom_call.1} parent=58 // loop_footer
                  %s234 = sadd.s32 1, %s230
                $region65: #{tpu_custom_call.1} parent=58 // loop_footer_branch
                  %229 = sbr.rel target = $region61
                $region66: #{tpu_custom_call.1} parent=58 // loop_exit
                  _
                loop: start=0, step=1, limit=1
                $region67: #{tpu_custom_call.1} parent=58 // loop_pre_header
                  _
                $region68: #{tpu_custom_call.1} parent=58 // loop_header
                  %s239 = sphi 0, %s243
                  %p240 = scmp.ge.s32.totalorder %s239, 1
                  %s244 = sphi %s205, %s205
                  %s245 = sphi %s201, %s201
                $region69: #{tpu_custom_call.1} parent=58 // loop_header_branch
                  %242 = sbr.rel (%p240) target = $region73
                $region70: #{tpu_custom_call.1} parent=58 // loop_body
                  %v246 = vld [vmem:[%s244] sm:$0xf]
                  %247 = vst [vmem:[%s245] sm:$0xf] %v246
                  %v248 = vld [vmem:[%s244 + $0x8] sm:$0xf]
                  %249 = vst [vmem:[%s245 + $0x4] sm:$0xf] %v248
                  %v250 = vld [vmem:[%s244 + $0x10] sm:$0xf]
                  %251 = vst [vmem:[%s245 + $0x8] sm:$0xf] %v250
                $region71: #{tpu_custom_call.1} parent=58 // loop_footer
                  %s243 = sadd.s32 1, %s239
                $region72: #{tpu_custom_call.1} parent=58 // loop_footer_branch
                  %238 = sbr.rel target = $region68
                $region73: #{tpu_custom_call.1} parent=58 // loop_exit
                  _
              $region59: #{tpu_custom_call.1} parent=43 // pred_fallthru
                _
            $region44: #{tpu_custom_call.1} parent=39 // pred_fallthru
              _
            // Predicated region
            $region45: #{tpu_custom_call.1} parent=39 // pred_check
              _
            $region46: #{tpu_custom_call.1} parent=39 // pred_check_branch
              %211 = sbr.rel (0) target = $region48
            $region47: #{tpu_custom_call.1} parent=39 // pred_region
              loop: start=0, step=1, limit=1
              $region49: #{tpu_custom_call.1} parent=47 // loop_pre_header
                _
              $region50: #{tpu_custom_call.1} parent=47 // loop_header
                %s214 = sphi 0, %s218
                %p215 = scmp.ge.s32.totalorder %s214, 1
                %s219 = sphi %s205, %s205
                %s220 = sphi %s201, %s201
              $region51: #{tpu_custom_call.1} parent=47 // loop_header_branch
                %217 = sbr.rel (%p215) target = $region55
              $region52: #{tpu_custom_call.1} parent=47 // loop_body
                %v221 = vld [vmem:[%s219] sm:$0xf]
                %222 = vst [vmem:[%s220] sm:$0xf] %v221
                %v223 = vld [vmem:[%s219 + $0x8] sm:$0xf]
                %224 = vst [vmem:[%s220 + $0x4] sm:$0xf] %v223
                %v225 = vld [vmem:[%s219 + $0x10] sm:$0xf]
                %226 = vst [vmem:[%s220 + $0x8] sm:$0xf] %v225
              $region53: #{tpu_custom_call.1} parent=47 // loop_footer
                %s218 = sadd.s32 1, %s214
              $region54: #{tpu_custom_call.1} parent=47 // loop_footer_branch
                %213 = sbr.rel target = $region50
              $region55: #{tpu_custom_call.1} parent=47 // loop_exit
                _
            $region48: #{tpu_custom_call.1} parent=39 // pred_fallthru
              _
          $region40: #{tpu_custom_call.1} parent=35 // pred_fallthru
            _
          %252 = vnop
        $region36: #{tpu_custom_call.1} parent=31 // pred_fallthru
          _
      $region32: #{tpu_custom_call.1} parent=5 // pred_fallthru
        _
      %p253 = scmp.le.s32.totalorder 1, %s14
      %p254 = scmp.lt.s32.totalorder %s14, 5
      %p255 = pnand %p253, %p254
      %p256 = pneg %p255
      // Predicated region
      $region74: #{tpu_custom_call.1} parent=5 // pred_check
        _
      $region75: #{tpu_custom_call.1} parent=5 // pred_check_branch
        %258 = sbr.rel (%p255) target = $region77
      $region76: #{tpu_custom_call.1} parent=5 // pred_region
        %s259 = ssub.s32 %s14, 1
        %s260 = sand.u32 %s41, 1
        %s261 = sand.u32 %s41, 1
        %s262 = smul.addr %s261, 12
        %s263 = scalar_lea.vmem [#allocation3], %s262
        // Predicated region
        $region78: #{tpu_custom_call.1} parent=76 // pred_check
          %p264 = pneg %p54
        $region79: #{tpu_custom_call.1} parent=76 // pred_check_branch
          %266 = sbr.rel (%p264) target = $region81
        $region80: #{tpu_custom_call.1} parent=76 // pred_region
          _
        $region81: #{tpu_custom_call.1} parent=76 // pred_fallthru
          _
        %s267 = sand.u32 %s41, 1
        %s268 = sand.u32 %s41, 1
        %s269 = smul.addr %s268, 12
        %s270 = scalar_lea.vmem [#allocation3], %s269
        %p271 = pneg %p54
        %p272 = pneg %p51
        %p273 = pneg %p75
        %p274 = pneg %p72
        %p275 = pneg %p96
        %p276 = pneg %p93
        %p277 = pneg %p117
        %p278 = pneg %p114
        %p279 = pneg %p138
        %p280 = pneg %p135
        %p281 = pneg %p164
        %p282 = pneg %p161
        %s283 = sand.u32 %s151, 1
        %s284 = scalar_lea.sflag [#allocation5], %s283
        %s285 = sand.u32 %s151, 1
        %s286 = scalar_lea.vmem [#allocation4], %s285
        %p288 = scmp.eq.s32.totalorder %s24, 0
        // Predicated region
        $region82: #{tpu_custom_call.1} parent=76 // pred_check
          %p289 = pneg %p288
        $region83: #{tpu_custom_call.1} parent=76 // pred_check_branch
          %291 = sbr.rel (%p289) target = $region85
        $region84: #{tpu_custom_call.1} parent=76 // pred_region
          %vm292 = vcmask 7168
          %293 = vst.msk [vmem:[#allocation2] sm:$0xff] %vm292, 0.0
          %294 = vst.msk [vmem:[#allocation2 + $0x8] sm:$0xff] %vm292, 0.0
          %295 = vst.msk [vmem:[#allocation2 + $0x10] sm:$0xff] %vm292, 0.0
          %296 = vst.msk [vmem:[#allocation2 + $0x18] sm:$0xff] %vm292, 0.0
          %297 = vst.msk [vmem:[#allocation2 + $0x20] sm:$0xff] %vm292, 0.0
          %298 = vst.msk [vmem:[#allocation2 + $0x28] sm:$0xff] %vm292, 0.0
          %299 = vst.msk [vmem:[#allocation2 + $0x30] sm:$0xff] %vm292, 0.0
          %300 = vst.msk [vmem:[#allocation2 + $0x38] sm:$0xff] %vm292, 0.0
          %301 = vst.msk [vmem:[#allocation2 + $0x40] sm:$0xff] %vm292, 0.0
          %302 = vst.msk [vmem:[#allocation2 + $0x48] sm:$0xff] %vm292, 0.0
          %303 = vst.msk [vmem:[#allocation2 + $0x50] sm:$0xff] %vm292, 0.0
          %304 = vst.msk [vmem:[#allocation2 + $0x58] sm:$0xff] %vm292, 0.0
          %305 = vst.msk [vmem:[#allocation2 + $0x60] sm:$0xff] %vm292, 0.0
          %306 = vst.msk [vmem:[#allocation2 + $0x68] sm:$0xff] %vm292, 0.0
          %307 = vst.msk [vmem:[#allocation2 + $0x70] sm:$0xff] %vm292, 0.0
          %308 = vst.msk [vmem:[#allocation2 + $0x78] sm:$0xff] %vm292, 0.0
        $region85: #{tpu_custom_call.1} parent=76 // pred_fallthru
          _
        %v309 = vld [vmem:[%s263] sm:$0xf]
        %v310 = vld [vmem:[%s263 + $0x4] sm:$0xf]
        %v311 = vld [vmem:[%s263 + $0x8] sm:$0x1]
        %v312 = vld [vmem:[%s1] sm:$0xf]
        %v313 = vld [vmem:[%s1 + $0x4] sm:$0xf]
        %v314 = vld [vmem:[%s1 + $0x8] sm:$0xf]
        %v315 = vld [vmem:[%s1 + $0xc] sm:$0xf]
        %v316 = vld [vmem:[%s1 + $0x10] sm:$0xf]
        %v317 = vld [vmem:[%s1 + $0x14] sm:$0xf]
        %v318 = vld [vmem:[%s1 + $0x18] sm:$0xf]
        %v319 = vld [vmem:[%s1 + $0x1c] sm:$0xf]
        %v320 = vld [vmem:[%s1 + $0x20] sm:$0xf]
        %v321 = vld [vmem:[%s1 + $0x24] sm:$0xf]
        %v322 = vld [vmem:[%s1 + $0x28] sm:$0xf]
        %v323 = vld [vmem:[%s1 + $0x2c] sm:$0xf]
        %v324 = vld [vmem:[%s1 + $0x30] sm:$0xf]
        %v325 = vld [vmem:[%s1 + $0x34] sm:$0xf]
        %v326 = vld [vmem:[%s1 + $0x38] sm:$0xf]
        %v327 = vld [vmem:[%s1 + $0x3c] sm:$0xf]
        %v328 = vld [vmem:[%s2] sm:$0xff]
        %v329 = vld [vmem:[%s2 + $0x8] sm:$0xff]
        %v330 = vld [vmem:[%s2 + $0x10] sm:$0xff]
        %v331 = vld [vmem:[%s2 + $0x18] sm:$0xff]
        %v332 = vld [vmem:[%s2 + $0x20] sm:$0xff]
        %v333 = vld [vmem:[%s2 + $0x28] sm:$0xff]
        %v334 = vld [vmem:[%s2 + $0x30] sm:$0xff]
        %v335 = vld [vmem:[%s2 + $0x38] sm:$0xff]
        %v336 = vld [vmem:[%s2 + $0x40] sm:$0xff]
        %v337 = vld [vmem:[%s2 + $0x48] sm:$0xff]
        %v338 = vld [vmem:[%s2 + $0x50] sm:$0xff]
        %v339 = vld [vmem:[%s2 + $0x58] sm:$0xff]
        %v340 = vld [vmem:[%s2 + $0x60] sm:$0xff]
        %v341 = vld [vmem:[%s2 + $0x68] sm:$0xff]
        %v342 = vld [vmem:[%s2 + $0x70] sm:$0xff]
        %v343 = vld [vmem:[%s2 + $0x78] sm:$0xff]
        %345 = vset.pattern.permute.xlu0 0
        %346 = vperm.xlu0 %345, %v328
        %v347 = vpop.permute.xlu0 %346
        %350 = vset.pattern.permute.xlu0 0
        %351 = vperm.xlu0 %350, %v329
        %v352 = vpop.permute.xlu0 %351
        %355 = vset.pattern.permute.xlu0 0
        %356 = vperm.xlu0 %355, %v330
        %v357 = vpop.permute.xlu0 %356
        %360 = vset.pattern.permute.xlu0 0
        %361 = vperm.xlu0 %360, %v331
        %v362 = vpop.permute.xlu0 %361
        %365 = vset.pattern.permute.xlu0 0
        %366 = vperm.xlu0 %365, %v332
        %v367 = vpop.permute.xlu0 %366
        %370 = vset.pattern.permute.xlu0 0
        %371 = vperm.xlu0 %370, %v333
        %v372 = vpop.permute.xlu0 %371
        %375 = vset.pattern.permute.xlu0 0
        %376 = vperm.xlu0 %375, %v334
        %v377 = vpop.permute.xlu0 %376
        %380 = vset.pattern.permute.xlu0 0
        %381 = vperm.xlu0 %380, %v335
        %v382 = vpop.permute.xlu0 %381
        %385 = vset.pattern.permute.xlu0 0
        %386 = vperm.xlu0 %385, %v336
        %v387 = vpop.permute.xlu0 %386
        %390 = vset.pattern.permute.xlu0 0
        %391 = vperm.xlu0 %390, %v337
        %v392 = vpop.permute.xlu0 %391
        %395 = vset.pattern.permute.xlu0 0
        %396 = vperm.xlu0 %395, %v338
        %v397 = vpop.permute.xlu0 %396
        %400 = vset.pattern.permute.xlu0 0
        %401 = vperm.xlu0 %400, %v339
        %v402 = vpop.permute.xlu0 %401
        %405 = vset.pattern.permute.xlu0 0
        %406 = vperm.xlu0 %405, %v340
        %v407 = vpop.permute.xlu0 %406
        %410 = vset.pattern.permute.xlu0 0
        %411 = vperm.xlu0 %410, %v341
        %v412 = vpop.permute.xlu0 %411
        %415 = vset.pattern.permute.xlu0 0
        %416 = vperm.xlu0 %415, %v342
        %v417 = vpop.permute.xlu0 %416
        %420 = vset.pattern.permute.xlu0 0
        %421 = vperm.xlu0 %420, %v343
        %v422 = vpop.permute.xlu0 %421
        %v440 = vunpack.c.l.b16 %v312
        %v441 = vunpack.c.l.b16 %v313
        %v442 = vunpack.c.l.b16 %v314
        %v443 = vunpack.c.l.b16 %v315
        %v444 = vunpack.c.l.b16 %v316
        %v445 = vunpack.c.l.b16 %v317
        %v446 = vunpack.c.l.b16 %v318
        %v447 = vunpack.c.l.b16 %v319
        %v448 = vunpack.c.l.b16 %v320
        %v449 = vunpack.c.l.b16 %v321
        %v450 = vunpack.c.l.b16 %v322
        %v451 = vunpack.c.l.b16 %v323
        %v452 = vunpack.c.l.b16 %v324
        %v453 = vunpack.c.l.b16 %v325
        %v454 = vunpack.c.l.b16 %v326
        %v455 = vunpack.c.l.b16 %v327
        %v456 = vpack.c.b16 %v441, %v440
        %v457 = vpack.c.b16 %v443, %v442
        %v458 = vpack.c.b16 %v445, %v444
        %v459 = vpack.c.b16 %v447, %v446
        %v460 = vpack.c.b16 %v449, %v448
        %v461 = vpack.c.b16 %v451, %v450
        %v462 = vpack.c.b16 %v453, %v452
        %v463 = vpack.c.b16 %v455, %v454
        %v467 = vunpack.c.l.b16 %v309
        %v468 = vunpack.c.l.b16 %v310
        %v469 = vunpack.c.l.b16 %v311
        %v470 = vpack.c.b16 %v468, %v467
        %v471 = vpack.c.b16 %v469, %v469
        %vm473 = vcmask 146432
        %v475 = vsel %vm473, %v456, 0
        %v478 = vsel %vm473, %v457, 0
        %v481 = vsel %vm473, %v458, 0
        %v484 = vsel %vm473, %v459, 0
        %v487 = vsel %vm473, %v460, 0
        %v490 = vsel %vm473, %v461, 0
        %v493 = vsel %vm473, %v462, 0
        %v496 = vsel %vm473, %v463, 0
        %vm498 = vcmask 1040384
        %v500 = vsel %vm498, %v471, 0
        %502 = vmatprep.subr.bf16.mxu0 0
        %503 = vmatpush1.bf16.msra.mxu0 %v470
        %504 = vmatprep.subr.bf16.mxu0 0
        %505 = vmatpush1.bf16.msra.mxu0 %v500
        %506 = vmatprep.subr.bf16.mxu0 0
        %507 = vmatpush1.bf16.msra.mxu0 0
        %508 = vmatprep.subr.bf16.mxu0 0
        %509 = vmatpush1.bf16.msra.mxu0 0
        %510 = vmatprep.subr.bf16.mxu0 0
        %511 = vmatpush1.bf16.msra.mxu0 0
        %512 = vmatprep.subr.bf16.mxu0 0
        %513 = vmatpush1.bf16.msra.mxu0 0
        %514 = vmatprep.subr.bf16.mxu0 0
        %515 = vmatpush1.bf16.msra.mxu0 0
        %516 = vmatprep.subr.bf16.mxu0 0
        %517 = vmatpush1.bf16.msra.mxu0 0
        %518 = vmatprep.subr.bf16.mxu0 0
        %519 = vmatpush1.bf16.msra.mxu0 0
        %520 = vmatprep.subr.bf16.mxu0 0
        %521 = vmatpush1.bf16.msra.mxu0 0
        %522 = vmatprep.subr.bf16.mxu0 0
        %523 = vmatpush1.bf16.msra.mxu0 0
        %524 = vmatprep.subr.bf16.mxu0 0
        %525 = vmatpush1.bf16.msra.mxu0 0
        %526 = vmatprep.subr.bf16.mxu0 0
        %527 = vmatpush1.bf16.msra.mxu0 0
        %528 = vmatprep.subr.bf16.mxu0 0
        %529 = vmatpush1.bf16.msra.mxu0 0
        %530 = vmatprep.subr.bf16.mxu0 0
        %531 = vmatpush1.bf16.msra.mxu0 0
        %532 = vmatprep.subr.bf16.mxu0 0
        %533 = vmatpush1.bf16.msra.mxu0 0
        %534 = vmatprep.mubr.bf16.mxu0 0
        %535 = vmatmul.mubr.bf16.gmra.mrb[0].mxu0 %v475
        %v536 = vpop.f32.mrb[0].mxu0
        %v537 = vadd.f32 %v347, %v536
        %v538 = vpop.f32.mrb[0].mxu0
        %v539 = vpop.f32.mrb[0].mxu0
        %v540 = vadd.f32 %v352, %v539
        %v541 = vpop.f32.mrb[0].mxu0
        %542 = vmatprep.mubr.bf16.mxu0 0
        %543 = vmatmul.mubr.bf16.gmra.mrb[0].mxu0 %v478
        %v544 = vpop.f32.mrb[0].mxu0
        %v545 = vadd.f32 %v357, %v544
        %v546 = vpop.f32.mrb[0].mxu0
        %v547 = vpop.f32.mrb[0].mxu0
        %v548 = vadd.f32 %v362, %v547
        %v549 = vpop.f32.mrb[0].mxu0
        %550 = vmatprep.mubr.bf16.mxu0 0
        %551 = vmatmul.mubr.bf16.gmra.mrb[0].mxu0 %v481
        %v552 = vpop.f32.mrb[0].mxu0
        %v553 = vadd.f32 %v367, %v552
        %v554 = vpop.f32.mrb[0].mxu0
        %v555 = vpop.f32.mrb[0].mxu0
        %v556 = vadd.f32 %v372, %v555
        %v557 = vpop.f32.mrb[0].mxu0
        %558 = vmatprep.mubr.bf16.mxu0 0
        %559 = vmatmul.mubr.bf16.gmra.mrb[0].mxu0 %v484
        %v560 = vpop.f32.mrb[0].mxu0
        %v561 = vadd.f32 %v377, %v560
        %v562 = vpop.f32.mrb[0].mxu0
        %v563 = vpop.f32.mrb[0].mxu0
        %v564 = vadd.f32 %v382, %v563
        %v565 = vpop.f32.mrb[0].mxu0
        %566 = vmatprep.mubr.bf16.mxu0 0
        %567 = vmatmul.mubr.bf16.gmra.mrb[0].mxu0 %v487
        %v568 = vpop.f32.mrb[0].mxu0
        %v569 = vadd.f32 %v387, %v568
        %v570 = vpop.f32.mrb[0].mxu0
        %v571 = vpop.f32.mrb[0].mxu0
        %v572 = vadd.f32 %v392, %v571
        %v573 = vpop.f32.mrb[0].mxu0
        %574 = vmatprep.mubr.bf16.mxu0 0
        %575 = vmatmul.mubr.bf16.gmra.mrb[0].mxu0 %v490
        %v576 = vpop.f32.mrb[0].mxu0
        %v577 = vadd.f32 %v397, %v576
        %v578 = vpop.f32.mrb[0].mxu0
        %v579 = vpop.f32.mrb[0].mxu0
        %v580 = vadd.f32 %v402, %v579
        %v581 = vpop.f32.mrb[0].mxu0
        %582 = vmatprep.mubr.bf16.mxu0 0
        %583 = vmatmul.mubr.bf16.gmra.mrb[0].mxu0 %v493
        %v584 = vpop.f32.mrb[0].mxu0
        %v585 = vadd.f32 %v407, %v584
        %v586 = vpop.f32.mrb[0].mxu0
        %v587 = vpop.f32.mrb[0].mxu0
        %v588 = vadd.f32 %v412, %v587
        %v589 = vpop.f32.mrb[0].mxu0
        %590 = vmatprep.mubr.bf16.mxu0 0
        %591 = vmatmul.mubr.bf16.gmra.mrb[0].mxu0 %v496
        %v592 = vpop.f32.mrb[0].mxu0
        %v593 = vadd.f32 %v417, %v592
        %v594 = vpop.f32.mrb[0].mxu0
        %v595 = vpop.f32.mrb[0].mxu0
        %v596 = vadd.f32 %v422, %v595
        %v597 = vpop.f32.mrb[0].mxu0
        %598 = vdwg.mxu0
        %v599 = vmax.f32 %v537, 0.0
        %v600 = vmax.f32 %v540, 0.0
        %v601 = vmax.f32 %v545, 0.0
        %v602 = vmax.f32 %v548, 0.0
        %v603 = vmax.f32 %v553, 0.0
        %v604 = vmax.f32 %v556, 0.0
        %v605 = vmax.f32 %v561, 0.0
        %v606 = vmax.f32 %v564, 0.0
        %v607 = vmax.f32 %v569, 0.0
        %v608 = vmax.f32 %v572, 0.0
        %v609 = vmax.f32 %v577, 0.0
        %v610 = vmax.f32 %v580, 0.0
        %v611 = vmax.f32 %v585, 0.0
        %v612 = vmax.f32 %v588, 0.0
        %v613 = vmax.f32 %v593, 0.0
        %v614 = vmax.f32 %v596, 0.0
        %v615 = vld [vmem:[#allocation2] sm:$0xff]
        %v616 = vld [vmem:[#allocation2 + $0x8] sm:$0xff]
        %v617 = vld [vmem:[#allocation2 + $0x10] sm:$0xff]
        %v618 = vld [vmem:[#allocation2 + $0x18] sm:$0xff]
        %v619 = vld [vmem:[#allocation2 + $0x20] sm:$0xff]
        %v620 = vld [vmem:[#allocation2 + $0x28] sm:$0xff]
        %v621 = vld [vmem:[#allocation2 + $0x30] sm:$0xff]
        %v622 = vld [vmem:[#allocation2 + $0x38] sm:$0xff]
        %v623 = vld [vmem:[#allocation2 + $0x40] sm:$0xff]
        %v624 = vld [vmem:[#allocation2 + $0x48] sm:$0xff]
        %v625 = vld [vmem:[#allocation2 + $0x50] sm:$0xff]
        %v626 = vld [vmem:[#allocation2 + $0x58] sm:$0xff]
        %v627 = vld [vmem:[#allocation2 + $0x60] sm:$0xff]
        %v628 = vld [vmem:[#allocation2 + $0x68] sm:$0xff]
        %v629 = vld [vmem:[#allocation2 + $0x70] sm:$0xff]
        %v630 = vld [vmem:[#allocation2 + $0x78] sm:$0xff]
        %631 = vadd.xlane.f32.xlu0 %v599
        %v632 = vpop.xlane.xlu0 %631
        %633 = vadd.xlane.f32.xlu0 %v600
        %v634 = vpop.xlane.xlu0 %633
        %635 = vadd.xlane.f32.xlu0 %v601
        %v636 = vpop.xlane.xlu0 %635
        %637 = vadd.xlane.f32.xlu0 %v602
        %v638 = vpop.xlane.xlu0 %637
        %639 = vadd.xlane.f32.xlu0 %v603
        %v640 = vpop.xlane.xlu0 %639
        %641 = vadd.xlane.f32.xlu0 %v604
        %v642 = vpop.xlane.xlu0 %641
        %643 = vadd.xlane.f32.xlu0 %v605
        %v644 = vpop.xlane.xlu0 %643
        %645 = vadd.xlane.f32.xlu0 %v606
        %v646 = vpop.xlane.xlu0 %645
        %647 = vadd.xlane.f32.xlu0 %v607
        %v648 = vpop.xlane.xlu0 %647
        %649 = vadd.xlane.f32.xlu0 %v608
        %v650 = vpop.xlane.xlu0 %649
        %651 = vadd.xlane.f32.xlu0 %v609
        %v652 = vpop.xlane.xlu0 %651
        %653 = vadd.xlane.f32.xlu0 %v610
        %v654 = vpop.xlane.xlu0 %653
        %655 = vadd.xlane.f32.xlu0 %v611
        %v656 = vpop.xlane.xlu0 %655
        %657 = vadd.xlane.f32.xlu0 %v612
        %v658 = vpop.xlane.xlu0 %657
        %659 = vadd.xlane.f32.xlu0 %v613
        %v660 = vpop.xlane.xlu0 %659
        %661 = vadd.xlane.f32.xlu0 %v614
        %v662 = vpop.xlane.xlu0 %661
        %v663 = vadd.f32 %v615, %v632
        %v664 = vadd.f32 %v616, %v634
        %v665 = vadd.f32 %v617, %v636
        %v666 = vadd.f32 %v618, %v638
        %v667 = vadd.f32 %v619, %v640
        %v668 = vadd.f32 %v620, %v642
        %v669 = vadd.f32 %v621, %v644
        %v670 = vadd.f32 %v622, %v646
        %v671 = vadd.f32 %v623, %v648
        %v672 = vadd.f32 %v624, %v650
        %v673 = vadd.f32 %v625, %v652
        %v674 = vadd.f32 %v626, %v654
        %v675 = vadd.f32 %v627, %v656
        %v676 = vadd.f32 %v628, %v658
        %v677 = vadd.f32 %v629, %v660
        %v678 = vadd.f32 %v630, %v662
        %vm679 = vcmask 7168
        %680 = vst.msk [vmem:[#allocation2] sm:$0xff] %vm679, %v663
        %681 = vst.msk [vmem:[#allocation2 + $0x8] sm:$0xff] %vm679, %v664
        %682 = vst.msk [vmem:[#allocation2 + $0x10] sm:$0xff] %vm679, %v665
        %683 = vst.msk [vmem:[#allocation2 + $0x18] sm:$0xff] %vm679, %v666
        %684 = vst.msk [vmem:[#allocation2 + $0x20] sm:$0xff] %vm679, %v667
        %685 = vst.msk [vmem:[#allocation2 + $0x28] sm:$0xff] %vm679, %v668
        %686 = vst.msk [vmem:[#allocation2 + $0x30] sm:$0xff] %vm679, %v669
        %687 = vst.msk [vmem:[#allocation2 + $0x38] sm:$0xff] %vm679, %v670
        %688 = vst.msk [vmem:[#allocation2 + $0x40] sm:$0xff] %vm679, %v671
        %689 = vst.msk [vmem:[#allocation2 + $0x48] sm:$0xff] %vm679, %v672
        %690 = vst.msk [vmem:[#allocation2 + $0x50] sm:$0xff] %vm679, %v673
        %691 = vst.msk [vmem:[#allocation2 + $0x58] sm:$0xff] %vm679, %v674
        %692 = vst.msk [vmem:[#allocation2 + $0x60] sm:$0xff] %vm679, %v675
        %693 = vst.msk [vmem:[#allocation2 + $0x68] sm:$0xff] %vm679, %v676
        %694 = vst.msk [vmem:[#allocation2 + $0x70] sm:$0xff] %vm679, %v677
        %695 = vst.msk [vmem:[#allocation2 + $0x78] sm:$0xff] %vm679, %v678
        %p696 = scmp.eq.s32.totalorder %s24, 1
        // Predicated region
        $region86: #{tpu_custom_call.1} parent=76 // pred_check
          %p697 = pneg %p696
        $region87: #{tpu_custom_call.1} parent=76 // pred_check_branch
          %699 = sbr.rel (%p697) target = $region89
        $region88: #{tpu_custom_call.1} parent=76 // pred_region
          %v700 = vld [vmem:[#allocation2] sm:$0xff]
          %v701 = vld [vmem:[#allocation2 + $0x8] sm:$0xff]
          %v702 = vld [vmem:[#allocation2 + $0x10] sm:$0xff]
          %v703 = vld [vmem:[#allocation2 + $0x18] sm:$0xff]
          %v704 = vld [vmem:[#allocation2 + $0x20] sm:$0xff]
          %v705 = vld [vmem:[#allocation2 + $0x28] sm:$0xff]
          %v706 = vld [vmem:[#allocation2 + $0x30] sm:$0xff]
          %v707 = vld [vmem:[#allocation2 + $0x38] sm:$0xff]
          %v708 = vld [vmem:[#allocation2 + $0x40] sm:$0xff]
          %v709 = vld [vmem:[#allocation2 + $0x48] sm:$0xff]
          %v710 = vld [vmem:[#allocation2 + $0x50] sm:$0xff]
          %v711 = vld [vmem:[#allocation2 + $0x58] sm:$0xff]
          %v712 = vld [vmem:[#allocation2 + $0x60] sm:$0xff]
          %v713 = vld [vmem:[#allocation2 + $0x68] sm:$0xff]
          %v714 = vld [vmem:[#allocation2 + $0x70] sm:$0xff]
          %v715 = vld [vmem:[#allocation2 + $0x78] sm:$0xff]
          %v716 = vmul.f32 %v700, 0.00390625
          %v717 = vmul.f32 %v701, 0.00390625
          %v718 = vmul.f32 %v702, 0.00390625
          %v719 = vmul.f32 %v703, 0.00390625
          %v720 = vmul.f32 %v704, 0.00390625
          %v721 = vmul.f32 %v705, 0.00390625
          %v722 = vmul.f32 %v706, 0.00390625
          %v723 = vmul.f32 %v707, 0.00390625
          %v724 = vmul.f32 %v708, 0.00390625
          %v725 = vmul.f32 %v709, 0.00390625
          %v726 = vmul.f32 %v710, 0.00390625
          %v727 = vmul.f32 %v711, 0.00390625
          %v728 = vmul.f32 %v712, 0.00390625
          %v729 = vmul.f32 %v713, 0.00390625
          %v730 = vmul.f32 %v714, 0.00390625
          %v731 = vmul.f32 %v715, 0.00390625
          %v732 = vlaneseq
          %v733 = vshrl.u32 %v732, 7
          %v734 = vadd.s32 %v733, 8
          %v735 = vadd.s32 %v733, 16
          %v736 = vadd.s32 %v733, 24
          %v737 = vadd.s32 %v733, 32
          %v738 = vadd.s32 %v733, 40
          %v739 = vadd.s32 %v733, 48
          %v740 = vadd.s32 %v733, 56
          %v741 = vadd.s32 %v733, 64
          %v742 = vadd.s32 %v733, 72
          %v743 = vadd.s32 %v733, 80
          %v744 = vadd.s32 %v733, 88
          %v745 = vadd.s32 %v733, 96
          %v746 = vadd.s32 %v733, 104
          %v747 = vadd.s32 %v733, 112
          %v748 = vadd.s32 %v733, 120
          %v749 = vlaneseq
          %v750 = vand.u32 %v749, 127
          %vm751 = vcmp.eq.s32.totalorder %v733, %v750
          %vm752 = vcmp.eq.s32.totalorder %v734, %v750
          %vm753 = vcmp.eq.s32.totalorder %v735, %v750
          %vm754 = vcmp.eq.s32.totalorder %v736, %v750
          %vm755 = vcmp.eq.s32.totalorder %v737, %v750
          %vm756 = vcmp.eq.s32.totalorder %v738, %v750
          %vm757 = vcmp.eq.s32.totalorder %v739, %v750
          %vm758 = vcmp.eq.s32.totalorder %v740, %v750
          %vm759 = vcmp.eq.s32.totalorder %v741, %v750
          %vm760 = vcmp.eq.s32.totalorder %v742, %v750
          %vm761 = vcmp.eq.s32.totalorder %v743, %v750
          %vm762 = vcmp.eq.s32.totalorder %v744, %v750
          %vm763 = vcmp.eq.s32.totalorder %v745, %v750
          %vm764 = vcmp.eq.s32.totalorder %v746, %v750
          %vm765 = vcmp.eq.s32.totalorder %v747, %v750
          %vm766 = vcmp.eq.s32.totalorder %v748, %v750
          %v767 = vsel %vm751, 1.0, 0.0
          %v768 = vsel %vm752, 1.0, 0.0
          %v769 = vsel %vm753, 1.0, 0.0
          %v770 = vsel %vm754, 1.0, 0.0
          %v771 = vsel %vm755, 1.0, 0.0
          %v772 = vsel %vm756, 1.0, 0.0
          %v773 = vsel %vm757, 1.0, 0.0
          %v774 = vsel %vm758, 1.0, 0.0
          %v775 = vsel %vm759, 1.0, 0.0
          %v776 = vsel %vm760, 1.0, 0.0
          %v777 = vsel %vm761, 1.0, 0.0
          %v778 = vsel %vm762, 1.0, 0.0
          %v779 = vsel %vm763, 1.0, 0.0
          %v780 = vsel %vm764, 1.0, 0.0
          %v781 = vsel %vm765, 1.0, 0.0
          %v782 = vsel %vm766, 1.0, 0.0
          %784 = vset.pattern.permute.xlu0 0
          %785 = vperm.xlu0 %784, %v716
          %v786 = vpop.permute.xlu0 %785
          %789 = vset.pattern.permute.xlu0 0
          %790 = vperm.xlu0 %789, %v717
          %v791 = vpop.permute.xlu0 %790
          %794 = vset.pattern.permute.xlu0 0
          %795 = vperm.xlu0 %794, %v718
          %v796 = vpop.permute.xlu0 %795
          %799 = vset.pattern.permute.xlu0 0
          %800 = vperm.xlu0 %799, %v719
          %v801 = vpop.permute.xlu0 %800
          %804 = vset.pattern.permute.xlu0 0
          %805 = vperm.xlu0 %804, %v720
          %v806 = vpop.permute.xlu0 %805
          %809 = vset.pattern.permute.xlu0 0
          %810 = vperm.xlu0 %809, %v721
          %v811 = vpop.permute.xlu0 %810
          %814 = vset.pattern.permute.xlu0 0
          %815 = vperm.xlu0 %814, %v722
          %v816 = vpop.permute.xlu0 %815
          %819 = vset.pattern.permute.xlu0 0
          %820 = vperm.xlu0 %819, %v723
          %v821 = vpop.permute.xlu0 %820
          %824 = vset.pattern.permute.xlu0 0
          %825 = vperm.xlu0 %824, %v724
          %v826 = vpop.permute.xlu0 %825
          %829 = vset.pattern.permute.xlu0 0
          %830 = vperm.xlu0 %829, %v725
          %v831 = vpop.permute.xlu0 %830
          %834 = vset.pattern.permute.xlu0 0
          %835 = vperm.xlu0 %834, %v726
          %v836 = vpop.permute.xlu0 %835
          %839 = vset.pattern.permute.xlu0 0
          %840 = vperm.xlu0 %839, %v727
          %v841 = vpop.permute.xlu0 %840
          %844 = vset.pattern.permute.xlu0 0
          %845 = vperm.xlu0 %844, %v728
          %v846 = vpop.permute.xlu0 %845
          %849 = vset.pattern.permute.xlu0 0
          %850 = vperm.xlu0 %849, %v729
          %v851 = vpop.permute.xlu0 %850
          %854 = vset.pattern.permute.xlu0 0
          %855 = vperm.xlu0 %854, %v730
          %v856 = vpop.permute.xlu0 %855
          %859 = vset.pattern.permute.xlu0 0
          %860 = vperm.xlu0 %859, %v731
          %v861 = vpop.permute.xlu0 %860
          %v863 = vmul.f32 %v786, %v767
          %v864 = vmul.f32 %v791, %v768
          %v865 = vmul.f32 %v796, %v769
          %v866 = vmul.f32 %v801, %v770
          %v867 = vmul.f32 %v806, %v771
          %v868 = vmul.f32 %v811, %v772
          %v869 = vmul.f32 %v816, %v773
          %v870 = vmul.f32 %v821, %v774
          %v871 = vmul.f32 %v826, %v775
          %v872 = vmul.f32 %v831, %v776
          %v873 = vmul.f32 %v836, %v777
          %v874 = vmul.f32 %v841, %v778
          %v875 = vmul.f32 %v846, %v779
          %v876 = vmul.f32 %v851, %v780
          %v877 = vmul.f32 %v856, %v781
          %v878 = vmul.f32 %v861, %v782
          %v879 = vadd.f32 %v863, %v864
          %v880 = vadd.f32 %v879, %v865
          %v881 = vadd.f32 %v880, %v866
          %v882 = vadd.f32 %v881, %v867
          %v883 = vadd.f32 %v882, %v868
          %v884 = vadd.f32 %v883, %v869
          %v885 = vadd.f32 %v884, %v870
          %v886 = vadd.f32 %v885, %v871
          %v887 = vadd.f32 %v886, %v872
          %v888 = vadd.f32 %v887, %v873
          %v889 = vadd.f32 %v888, %v874
          %v890 = vadd.f32 %v889, %v875
          %v891 = vadd.f32 %v890, %v876
          %v892 = vadd.f32 %v891, %v877
          %v893 = vadd.f32 %v892, %v878
          %v894 = vrot.slane %v893, 4
          %v895 = vadd.f32 %v893, %v894
          %v896 = vrot.slane %v895, 2
          %v897 = vadd.f32 %v895, %v896
          %v898 = vrot.slane %v897, 1
          %v899 = vadd.f32 %v897, %v898
          %v900 = vld [vmem:[%s3] sm:$0xff]
          %v901 = vld [vmem:[%s3 + $0x8] sm:$0xff]
          %v902 = vld [vmem:[%s3 + $0x10] sm:$0xff]
          %v903 = vld [vmem:[%s3 + $0x18] sm:$0xff]
          %v904 = vld [vmem:[%s3 + $0x20] sm:$0xff]
          %v905 = vld [vmem:[%s3 + $0x28] sm:$0xff]
          %v906 = vld [vmem:[%s3 + $0x30] sm:$0xff]
          %v907 = vld [vmem:[%s3 + $0x38] sm:$0xff]
          %v908 = vld [vmem:[%s3 + $0x40] sm:$0xff]
          %v909 = vld [vmem:[%s3 + $0x48] sm:$0xff]
          %v910 = vld [vmem:[%s3 + $0x50] sm:$0xff]
          %v911 = vld [vmem:[%s3 + $0x58] sm:$0xff]
          %v912 = vld [vmem:[%s3 + $0x60] sm:$0xff]
          %v913 = vld [vmem:[%s3 + $0x68] sm:$0xff]
          %v914 = vld [vmem:[%s3 + $0x70] sm:$0xff]
          %v915 = vld [vmem:[%s3 + $0x78] sm:$0xff]
          %v916 = vld [vmem:[%s4] sm:$0x1]
          %917 = vmatprep.subr.mxu0 0.0
          %918 = vmatpush1.msra.mxu0 %v900
          %919 = vmatprep.subr.mxu0 0.0
          %920 = vmatpush1.msra.mxu0 %v901
          %921 = vmatprep.subr.mxu0 0.0
          %922 = vmatpush1.msra.mxu0 %v902
          %923 = vmatprep.subr.mxu0 0.0
          %924 = vmatpush1.msra.mxu0 %v903
          %925 = vmatprep.subr.mxu0 0.0
          %926 = vmatpush1.msra.mxu0 %v904
          %927 = vmatprep.subr.mxu0 0.0
          %928 = vmatpush1.msra.mxu0 %v905
          %929 = vmatprep.subr.mxu0 0.0
          %930 = vmatpush1.msra.mxu0 %v906
          %931 = vmatprep.subr.mxu0 0.0
          %932 = vmatpush1.msra.mxu0 %v907
          %933 = vmatprep.subr.mxu0 0.0
          %934 = vmatpush1.msra.mxu0 %v908
          %935 = vmatprep.subr.mxu0 0.0
          %936 = vmatpush1.msra.mxu0 %v909
          %937 = vmatprep.subr.mxu0 0.0
          %938 = vmatpush1.msra.mxu0 %v910
          %939 = vmatprep.subr.mxu0 0.0
          %940 = vmatpush1.msra.mxu0 %v911
          %941 = vmatprep.subr.mxu0 0.0
          %942 = vmatpush1.msra.mxu0 %v912
          %943 = vmatprep.subr.mxu0 0.0
          %944 = vmatpush1.msra.mxu0 %v913
          %945 = vmatprep.subr.mxu0 0.0
          %946 = vmatpush1.msra.mxu0 %v914
          %947 = vmatprep.subr.mxu0 0.0
          %948 = vmatpush1.msra.mxu0 %v915
          %949 = vmatprep.subr.mxu0 0.0
          %950 = vmatpush1.msra.mxu0 0.0
          %951 = vmatprep.subr.mxu0 0.0
          %952 = vmatpush1.msra.mxu0 0.0
          %953 = vmatprep.subr.mxu0 0.0
          %954 = vmatpush1.msra.mxu0 0.0
          %955 = vmatprep.subr.mxu0 0.0
          %956 = vmatpush1.msra.mxu0 0.0
          %957 = vmatprep.subr.mxu0 0.0
          %958 = vmatpush1.msra.mxu0 0.0
          %959 = vmatprep.subr.mxu0 0.0
          %960 = vmatpush1.msra.mxu0 0.0
          %961 = vmatprep.subr.mxu0 0.0
          %962 = vmatpush1.msra.mxu0 0.0
          %963 = vmatprep.subr.mxu0 0.0
          %964 = vmatpush1.msra.mxu0 0.0
          %965 = vmatprep.subr.mxu0 0.0
          %966 = vmatpush1.msra.mxu0 0.0
          %967 = vmatprep.subr.mxu0 0.0
          %968 = vmatpush1.msra.mxu0 0.0
          %969 = vmatprep.subr.mxu0 0.0
          %970 = vmatpush1.msra.mxu0 0.0
          %971 = vmatprep.subr.mxu0 0.0
          %972 = vmatpush1.msra.mxu0 0.0
          %973 = vmatprep.subr.mxu0 0.0
          %974 = vmatpush1.msra.mxu0 0.0
          %975 = vmatprep.subr.mxu0 0.0
          %976 = vmatpush1.msra.mxu0 0.0
          %977 = vmatprep.subr.mxu0 0.0
          %978 = vmatpush1.msra.mxu0 0.0
          %979 = vmatprep.subr.mxu0 0.0
          %980 = vmatpush1.msra.mxu0 0.0
          %981 = vmatprep.mubr.f32.mxu0 0.0
          %982 = vmatmul.mubr.f32.gmra.mrb[0].mxu0 %v899
          %v983 = vpop.f32.mrb[0].mxu0
          %v984 = vadd.f32 %v916, %v983
          %v985 = vpop.f32.mrb[0].mxu0
          %986 = vdwg.mxu0
          %987 = vst [vmem:[%s286] sm:$0x1] %v984
        $region89: #{tpu_custom_call.1} parent=76 // pred_fallthru
          _
        %s988 = sand.u32 %s151, 1
        %s989 = scalar_lea.sflag [#allocation5], %s988
        %s990 = sand.u32 %s151, 1
        %s991 = scalar_lea.vmem [#allocation4], %s990
        // Predicated region
        $region90: #{tpu_custom_call.1} parent=76 // pred_check
          %p992 = pneg %p161
        $region91: #{tpu_custom_call.1} parent=76 // pred_check_branch
          %994 = sbr.rel (%p992) target = $region93
        $region92: #{tpu_custom_call.1} parent=76 // pred_region
          %s996 = ssub.s32 16, 16
          %997 = vsyncadd %s989, %s996
          %s998 = smul.addr %s23, 16
          %s999 = scalar_lea.hbm %s5, %s998
          %s1001 = sshll.u32 %s991, 4
          %s1002 = int_to_ptr.vmem [resolvable:$true] %s1001
          %1004 = dma.vmem_to_hbm [thread:$0]  %s1002, 16, %s999, %s989
        $region93: #{tpu_custom_call.1} parent=76 // pred_fallthru
          _
      $region77: #{tpu_custom_call.1} parent=5 // pred_fallthru
        _
      %p1005 = scmp.le.s32.totalorder 2, %s14
      // Predicated region
      $region94: #{tpu_custom_call.1} parent=5 // pred_check
        %p1006 = pneg %p1005
      $region95: #{tpu_custom_call.1} parent=5 // pred_check_branch
        %1008 = sbr.rel (%p1006) target = $region97
      $region96: #{tpu_custom_call.1} parent=5 // pred_region
        %s1009 = ssub.s32 %s14, 2
        // Predicated region
        $region98: #{tpu_custom_call.1} parent=96 // pred_check
          %p1010 = pneg %p167
        $region99: #{tpu_custom_call.1} parent=96 // pred_check_branch
          %1012 = sbr.rel (%p1010) target = $region101
        $region100: #{tpu_custom_call.1} parent=96 // pred_region
          %s1013 = sand.u32 %s152, 1
          %s1014 = scalar_lea.sflag [#allocation5], %s1013
          %s1015 = sand.u32 %s152, 1
          %s1016 = scalar_lea.vmem [#allocation4], %s1015
          %1017 = dma.done %s1014, 16
        $region101: #{tpu_custom_call.1} parent=96 // pred_fallthru
          _
      $region97: #{tpu_custom_call.1} parent=5 // pred_fallthru
        _
    $region6: #{tpu_custom_call.1} parent=1 // loop_footer
      %s18 = sadd.s32 1, %s14
    $region7: #{tpu_custom_call.1} parent=1 // loop_footer_branch
      %13 = sbr.rel target = $region3
    $region8: #{tpu_custom_call.1} parent=1 // loop_exit
      _
    %1018 = vsyncpa [#allocation5], 1
    %s1019 = scalar_lea.sflag [#allocation5], 1
    %1020 = vsyncpa %s1019, 1

</llo_original>
